<compile_context>
chip_gen: v6e
topology: v6e:2x2x1
jax: 0.10.0
libtpu: 0.0.40
codegen_flags: <defaults>
</compile_context>

<pallas_src>
import jax
import jax.numpy as jnp
from jax.experimental import pallas as pl
from jax.experimental.pallas import tpu as pltpu


def _round_up(x, m):
    return (x + m - 1) // m * m


def _miou_kernel(x_ref, t_ref, out_ref, inter_acc, union_acc):
    """One (tR, tL) tile of the per-row IoU-loss reduction.

    x_ref, t_ref : (tR, tL) input tiles (input dtype, upcast in-kernel)
    out_ref      : (tR, 128) lane-dense per-row loss (loss broadcast over lanes)
    inter_acc    : (tR, 1) f32 VMEM scratch — running sum(x * t)
    union_acc    : (tR, 1) f32 VMEM scratch — running sum(x + t)
    """
    l = pl.program_id(1)

    @pl.when(l == 0)
    def _():
        inter_acc[...] = jnp.zeros_like(inter_acc)
        union_acc[...] = jnp.zeros_like(union_acc)

    x = x_ref[...].astype(jnp.float32)
    t = t_ref[...].astype(jnp.float32)

    # Two cross-lane (XLU) reductions per tile instead of three:
    #   union = sum(x) + sum(t) - inter == sum(x + t) - inter
    inter_acc[...] += jnp.sum(x * t, axis=-1, keepdims=True)
    union_acc[...] += jnp.sum(x + t, axis=-1, keepdims=True)

    @pl.when(l == pl.num_programs(1) - 1)
    def _():
        inter = inter_acc[...]                      # (tR, 1)
        union = union_acc[...] - inter              # (tR, 1)
        loss = 1.0 - inter / (union + 1e-8)         # (tR, 1), exact divide
        out_ref[...] = jnp.broadcast_to(loss, out_ref.shape)


def miou_loss(inputs, target, reduce=True, *, tile_r=256, tile_l=2048):
    """Pallas TPU implementation of mIoULoss.forward.

    inputs, target: identically shaped arrays; reduction over the last axis,
    mean over the remaining axes when reduce=True (matches PyTorch module).

    Default tiles (256, 2048) keep the double-buffered working set
    (2 inputs x 2 buffers x tR x tL x 4B ~ 8 MiB) inside the scoped-VMEM
    defaults of v5e (16 MiB), v6e (32 MiB) and v7x (32 MiB).
    """
    assert inputs.shape == target.shape
    *lead, L = inputs.shape
    R = 1
    for d in lead:
        R *= d

    x2 = inputs.reshape(R, L)
    t2 = target.reshape(R, L)

    # Clamp tiles to the (padded) problem size; keep (8, 128) alignment.
    tR = min(tile_r, _round_up(R, 8))
    tL = min(tile_l, _round_up(L, 128))

    R_pad = _round_up(R, tR)
    L_pad = _round_up(L, tL)

    if (R_pad, L_pad) != (R, L):
        # Zero padding is safe: padded columns add 0 to inter/union; padded
        # rows are sliced off before the mean (divide by the true R).
        pad = ((0, R_pad - R), (0, L_pad - L))
        x2 = jnp.pad(x2, pad)
        t2 = jnp.pad(t2, pad)

    grid = (R_pad // tR, L_pad // tL)   # reduction (L) axis last

    out = pl.pallas_call(
        _miou_kernel,
        out_shape=jax.ShapeDtypeStruct((R_pad, 128), jnp.float32),
        grid=grid,
        in_specs=[
            pl.BlockSpec((tR, tL), lambda r, l: (r, l)),
            pl.BlockSpec((tR, tL), lambda r, l: (r, l)),
        ],
        # Output block is constant along the L axis -> stays resident across
        # the reduction; written once per R tile at the last L step,
        # lane-dense (last dim 128) to avoid masked partial stores.
        out_specs=pl.BlockSpec((tR, 128), lambda r, l: (r, 0)),
        scratch_shapes=[
            pltpu.VMEM((tR, 1), jnp.float32),   # inter accumulator
            pltpu.VMEM((tR, 1), jnp.float32),   # sum(x + t) accumulator
        ],
        compiler_params=pltpu.CompilerParams(
            dimension_semantics=("parallel", "arbitrary"),
            vmem_limit_bytes=32 << 20,
        ),
    )(x2, t2)

    per_row = out[:R, 0]                 # drop padded rows / broadcast lanes

    if reduce:
        return jnp.mean(per_row)         # mean over the true R rows
    return per_row.reshape(tuple(lead))


def _reference(inputs, target, reduce=True):
    inter = (inputs * target).sum(-1)
    union = inputs.sum(-1) + target.sum(-1) - inter
    loss = 1.0 - inter / (union + 1e-8)
    if reduce:
        loss = jnp.mean(loss)
    return loss


if __name__ == "__main__":
    key = jax.random.PRNGKey(0)
    k1, k2, k3, k4 = jax.random.split(key, 4)

    # Small shape consistent with the module: (batch, channels, seq),
    # reduction over the last (seq) axis.
    B, C, L = 2, 4, 16
    inputs = jax.random.uniform(k1, (B, C, L), dtype=jnp.float32)
    target = (jax.random.uniform(k2, (B, C, L)) > 0.5).astype(jnp.float32)

    # reduce=True (default) path.
    loss = jax.block_until_ready(miou_loss(inputs, target, reduce=True))
    ref = _reference(inputs, target, reduce=True)
    assert jnp.allclose(loss, ref, atol=1e-5, rtol=1e-5), (loss, ref)

    # reduce=False path.
    loss_nr = jax.block_until_ready(miou_loss(inputs, target, reduce=False))
    ref_nr = _reference(inputs, target, reduce=False)
    assert loss_nr.shape == ref_nr.shape
    assert jnp.allclose(loss_nr, ref_nr, atol=1e-5, rtol=1e-5)

    # Non-aligned shape forcing R/L padding and a multi-step reduction grid
    # (exercises the accumulator + zero-padding paths at small scale).
    B2, C2, L2 = 2, 20, 200
    x_b = jax.random.uniform(k3, (B2, C2, L2), dtype=jnp.float32)
    t_b = (jax.random.uniform(k4, (B2, C2, L2)) > 0.5).astype(jnp.float32)
    loss_b = jax.block_until_ready(
        miou_loss(x_b, t_b, reduce=True, tile_r=8, tile_l=128))
    ref_b = _reference(x_b, t_b, reduce=True)
    assert jnp.allclose(loss_b, ref_b, atol=1e-5, rtol=1e-5), (loss_b, ref_b)

    # bf16 inputs stay bf16 on the HBM path; f32 accumulation inside kernel.
    x_bf = inputs.astype(jnp.bfloat16)
    t_bf = target.astype(jnp.bfloat16)
    loss_bf = jax.block_until_ready(miou_loss(x_bf, t_bf, reduce=True))
    ref_bf = _reference(x_bf.astype(jnp.float32), t_bf.astype(jnp.float32),
                        reduce=True)
    assert jnp.allclose(loss_bf, ref_bf, atol=1e-3, rtol=1e-3), (loss_bf, ref_bf)

    print("KERNEL_OK")
</pallas_src>

<mosaic_0001>
module attributes {stable_mosaic.version = 11 : i64} {
  func.func @_miou_kernel(%arg0: i32, %arg1: i32, %arg2: memref<8x128xf32, #tpu.memory_space<vmem>>, %arg3: memref<8x128xf32, #tpu.memory_space<vmem>>, %arg4: memref<8x128xf32, #tpu.memory_space<vmem>>, %arg5: memref<8x1xf32, #tpu.memory_space<vmem>>, %arg6: memref<8x1xf32, #tpu.memory_space<vmem>>) attributes {dimension_semantics = [#tpu.dimension_semantics<parallel>, #tpu.dimension_semantics<arbitrary>], iteration_bounds = array<i64: 1, 1>, scalar_prefetch = 0 : i64, scratch_operands = 2 : i64, tpu.core_type = #tpu.core_type<tc>, window_params = [{transform_indices = @transform_0, window_bounds = array<i64: 8, 128>}, {transform_indices = @transform_1, window_bounds = array<i64: 8, 128>}, {transform_indices = @transform_2, window_bounds = array<i64: 8, 128>}]} {
    %c0_i32 = arith.constant 0 : i32
    %0 = arith.cmpi eq, %arg1, %c0_i32 : i32
    %1 = arith.extui %0 : i1 to i32
    %c0_i32_0 = arith.constant 0 : i32
    %2 = arith.cmpi ne, %1, %c0_i32_0 : i32
    scf.if %2 {
      %cst_15 = arith.constant 0.000000e+00 : f32
      %20 = vector.broadcast %cst_15 : f32 to vector<8x1xf32>
      %c0_16 = arith.constant 0 : index
      %c0_17 = arith.constant 0 : index
      %21 = vector.load %arg5[%c0_16, %c0_17] : memref<8x1xf32, #tpu.memory_space<vmem>>, vector<8x1xf32>
      tpu.vector_store %arg5[%c0_16, %c0_17], %20 {strides = array<i32>} : memref<8x1xf32, #tpu.memory_space<vmem>>, vector<8x1xf32>,
      %cst_18 = arith.constant 0.000000e+00 : f32
      %22 = vector.broadcast %cst_18 : f32 to vector<8x1xf32>
      %c0_19 = arith.constant 0 : index
      %c0_20 = arith.constant 0 : index
      %23 = vector.load %arg6[%c0_19, %c0_20] : memref<8x1xf32, #tpu.memory_space<vmem>>, vector<8x1xf32>
      tpu.vector_store %arg6[%c0_19, %c0_20], %22 {strides = array<i32>} : memref<8x1xf32, #tpu.memory_space<vmem>>, vector<8x1xf32>,
    } else {
    }
    %c0 = arith.constant 0 : index
    %c0_1 = arith.constant 0 : index
    %3 = vector.load %arg2[%c0, %c0_1] : memref<8x128xf32, #tpu.memory_space<vmem>>, vector<8x128xf32>
    %c0_2 = arith.constant 0 : index
    %c0_3 = arith.constant 0 : index
    %4 = vector.load %arg3[%c0_2, %c0_3] : memref<8x128xf32, #tpu.memory_space<vmem>>, vector<8x128xf32>
    %c0_4 = arith.constant 0 : index
    %c0_5 = arith.constant 0 : index
    %5 = vector.load %arg5[%c0_4, %c0_5] : memref<8x1xf32, #tpu.memory_space<vmem>>, vector<8x1xf32>
    %6 = arith.mulf %3, %4 : vector<8x128xf32>
    %cst = arith.constant dense<0.000000e+00> : vector<8xf32>
    %7 = vector.multi_reduction <add>, %6, %cst [1] : vector<8x128xf32> to vector<8xf32>
    %8 = vector.shape_cast %7 : vector<8xf32> to vector<8x1xf32>
    %9 = arith.addf %5, %8 : vector<8x1xf32>
    %c0_6 = arith.constant 0 : index
    %c0_7 = arith.constant 0 : index
    %10 = vector.load %arg5[%c0_6, %c0_7] : memref<8x1xf32, #tpu.memory_space<vmem>>, vector<8x1xf32>
    tpu.vector_store %arg5[%c0_6, %c0_7], %9 {strides = array<i32>} : memref<8x1xf32, #tpu.memory_space<vmem>>, vector<8x1xf32>,
    %c0_8 = arith.constant 0 : index
    %c0_9 = arith.constant 0 : index
    %11 = vector.load %arg6[%c0_8, %c0_9] : memref<8x1xf32, #tpu.memory_space<vmem>>, vector<8x1xf32>
    %12 = arith.addf %3, %4 : vector<8x128xf32>
    %cst_10 = arith.constant dense<0.000000e+00> : vector<8xf32>
    %13 = vector.multi_reduction <add>, %12, %cst_10 [1] : vector<8x128xf32> to vector<8xf32>
    %14 = vector.shape_cast %13 : vector<8xf32> to vector<8x1xf32>
    %15 = arith.addf %11, %14 : vector<8x1xf32>
    %c0_11 = arith.constant 0 : index
    %c0_12 = arith.constant 0 : index
    %16 = vector.load %arg6[%c0_11, %c0_12] : memref<8x1xf32, #tpu.memory_space<vmem>>, vector<8x1xf32>
    tpu.vector_store %arg6[%c0_11, %c0_12], %15 {strides = array<i32>} : memref<8x1xf32, #tpu.memory_space<vmem>>, vector<8x1xf32>,
    %c0_i32_13 = arith.constant 0 : i32
    %17 = arith.cmpi eq, %arg1, %c0_i32_13 : i32
    %18 = arith.extui %17 : i1 to i32
    %c0_i32_14 = arith.constant 0 : i32
    %19 = arith.cmpi ne, %18, %c0_i32_14 : i32
    scf.if %19 {
      %c0_15 = arith.constant 0 : index
      %c0_16 = arith.constant 0 : index
      %20 = vector.load %arg5[%c0_15, %c0_16] : memref<8x1xf32, #tpu.memory_space<vmem>>, vector<8x1xf32>
      %c0_17 = arith.constant 0 : index
      %c0_18 = arith.constant 0 : index
      %21 = vector.load %arg6[%c0_17, %c0_18] : memref<8x1xf32, #tpu.memory_space<vmem>>, vector<8x1xf32>
      %22 = arith.subf %21, %20 : vector<8x1xf32>
      %cst_19 = arith.constant 9.99999993E-9 : f32
      %23 = vector.broadcast %cst_19 : f32 to vector<8x1xf32>
      %24 = arith.addf %22, %23 : vector<8x1xf32>
      %25 = arith.divf %20, %24 : vector<8x1xf32>
      %cst_20 = arith.constant 1.000000e+00 : f32
      %26 = vector.broadcast %cst_20 : f32 to vector<8x1xf32>
      %27 = arith.subf %26, %25 : vector<8x1xf32>
      %28 = vector.shape_cast %27 : vector<8x1xf32> to vector<8x1xf32>
      %29 = vector.broadcast %28 : vector<8x1xf32> to vector<8x128xf32>
      %c0_21 = arith.constant 0 : index
      %c0_22 = arith.constant 0 : index
      %30 = vector.load %arg4[%c0_21, %c0_22] : memref<8x128xf32, #tpu.memory_space<vmem>>, vector<8x128xf32>
      tpu.vector_store %arg4[%c0_21, %c0_22], %29 {strides = array<i32>} : memref<8x128xf32, #tpu.memory_space<vmem>>, vector<8x128xf32>,
    } else {
    }
    return
  }
  func.func @transform_0(%arg0: i32, %arg1: i32) -> (i32, i32) {
    %c0_i32 = arith.constant 0 : i32
    return %arg0, %arg1 : i32, i32
  }
  func.func @transform_1(%arg0: i32, %arg1: i32) -> (i32, i32) {
    %c0_i32 = arith.constant 0 : i32
    return %arg0, %arg1 : i32, i32
  }
  func.func @transform_2(%arg0: i32, %arg1: i32) -> (i32, i32) {
    %c0_i32 = arith.constant 0 : i32
    %c0_i32_0 = arith.constant 0 : i32
    return %arg0, %c0_i32 : i32, i32
  }
}

</mosaic_0001>

<llo_original>
// kernel: tpu_custom_call.1
$region0: #{tpu_custom_call.1}
  #allocation0 [shape = 'u32[]', space=smem, size = 0x4, offset = 0x4, fixed_abs, tag = 'smem constant byte address 0x4 - core index']
  #allocation1 [shape = 'u32[144,128]{1,0:T(1,128)}', space=vmem, size = 0x12000, scoped, tag = 'internal scratch']
  #allocation2 [shape = 'f32[8,1]{1,0:T(8,128)}', space=vmem, size = 0x1000, scoped, tag = 'scratch operand']
  #allocation3 [shape = 'f32[8,1]{1,0:T(8,128)}', space=vmem, size = 0x1000, scoped, tag = 'scratch operand']
  %s0 = inlined_call_operand.hbm [shape: f32[8,128], index: 0, kind: input, shape index: {}]
  %s1 = inlined_call_operand.hbm [shape: f32[8,128], index: 1, kind: input, shape index: {}]
  %s2 = inlined_call_operand.hbm [shape: f32[8,128], index: 2, kind: output, shape index: {}]
  %s3 = sld [smem:[#allocation0]]
  $region34: #{tpu_custom_call.1} parent=0
    _
  %s5 = ssub.s32 1, %s3
  %s6 = scalar_select 0, %s5, %s3
  $region1: #{tpu_custom_call.1} parent=0
    #allocation4 [shape = 'u8[4096]{0}', space=vmem, size = 0x1000, scoped, tag = 'input window, operand 0, single buffered']
    #allocation5 [shape = 's32[1]{0}', space=sflag, size = 0x4, scoped, tag = 'scoped memory for tpu_custom_call.1']
    #allocation6 [shape = 's32[1]{0}', space=sflag, size = 0x4, scoped, tag = 'scoped memory for tpu_custom_call.1']
    #allocation7 [shape = 'u8[4096]{0}', space=vmem, size = 0x1000, scoped, tag = 'input window, operand 1, single buffered']
    #allocation8 [shape = 's32[1]{0}', space=sflag, size = 0x4, scoped, tag = 'scoped memory for tpu_custom_call.1']
    #allocation9 [shape = 'u8[4096]{0}', space=vmem, size = 0x1000, scoped, tag = 'output window, operand 0, single buffered']
    %7 = vsyncpa [#allocation5], 0
    %8 = vsyncpa [#allocation8], 0
    %9 = vsyncpa [#allocation6], 0
    // Predicated region
    $region2: #{tpu_custom_call.1} parent=1 // pred_check
      _
    $region3: #{tpu_custom_call.1} parent=1 // pred_check_branch
      %11 = sbr.rel (0) target = $region5
    $region4: #{tpu_custom_call.1} parent=1 // pred_region
      %s13 = ssub.s32 128, 128
      %14 = vsyncadd [#allocation5], %s13
      %s16 = sshll.u32 [#allocation4], 4
      %s17 = int_to_ptr.vmem [resolvable:$true] %s16
      %19 = dma.hbm_to_vmem [thread:$0]  %s0, 128, %s17, [#allocation5]
    $region5: #{tpu_custom_call.1} parent=1 // pred_fallthru
      _
    // Predicated region
    $region6: #{tpu_custom_call.1} parent=1 // pred_check
      _
    $region7: #{tpu_custom_call.1} parent=1 // pred_check_branch
      %21 = sbr.rel (0) target = $region9
    $region8: #{tpu_custom_call.1} parent=1 // pred_region
      %s23 = ssub.s32 128, 128
      %24 = vsyncadd [#allocation8], %s23
      %s26 = sshll.u32 [#allocation7], 4
      %s27 = int_to_ptr.vmem [resolvable:$true] %s26
      %29 = dma.hbm_to_vmem [thread:$0]  %s1, 128, %s27, [#allocation8]
    $region9: #{tpu_custom_call.1} parent=1 // pred_fallthru
      _
    // Predicated region
    $region10: #{tpu_custom_call.1} parent=1 // pred_check
      _
    $region11: #{tpu_custom_call.1} parent=1 // pred_check_branch
      %31 = sbr.rel (0) target = $region13
    $region12: #{tpu_custom_call.1} parent=1 // pred_region
      %32 = dma.done [#allocation5], 128
    $region13: #{tpu_custom_call.1} parent=1 // pred_fallthru
      _
    // Predicated region
    $region14: #{tpu_custom_call.1} parent=1 // pred_check
      _
    $region15: #{tpu_custom_call.1} parent=1 // pred_check_branch
      %34 = sbr.rel (0) target = $region17
    $region16: #{tpu_custom_call.1} parent=1 // pred_region
      %35 = dma.done [#allocation8], 128
    $region17: #{tpu_custom_call.1} parent=1 // pred_fallthru
      _
    %p36 = scmp.eq.s32.totalorder 0, 0
    // Predicated region
    $region18: #{tpu_custom_call.1} parent=1 // pred_check
      %p37 = pneg %p36
    $region19: #{tpu_custom_call.1} parent=1 // pred_check_branch
      %39 = sbr.rel (%p37) target = $region21
    $region20: #{tpu_custom_call.1} parent=1 // pred_region
      %vm40 = vcmask 7168
      %41 = vst.msk [vmem:[#allocation2] sm:$0xff] %vm40, 0.0
      %42 = vst.msk [vmem:[#allocation3] sm:$0xff] %vm40, 0.0
    $region21: #{tpu_custom_call.1} parent=1 // pred_fallthru
      _
    %v43 = vld [vmem:[#allocation4] sm:$0xff]
    %v44 = vld [vmem:[#allocation7] sm:$0xff]
    %v45 = vld [vmem:[#allocation2] sm:$0xff]
    %v46 = vmul.f32 %v43, %v44
    %47 = vadd.xlane.f32.xlu0 %v46
    %v48 = vpop.xlane.xlu0 %47
    %v49 = vadd.f32 %v45, %v48
    %vm50 = vcmask 7168
    %51 = vst.msk [vmem:[#allocation2] sm:$0xff] %vm50, %v49
    %v52 = vld [vmem:[#allocation3] sm:$0xff]
    %v53 = vadd.f32 %v43, %v44
    %54 = vadd.xlane.f32.xlu0 %v53
    %v55 = vpop.xlane.xlu0 %54
    %v56 = vadd.f32 %v52, %v55
    %57 = vst.msk [vmem:[#allocation3] sm:$0xff] %vm50, %v56
    // Predicated region
    $region22: #{tpu_custom_call.1} parent=1 // pred_check
      %p58 = pneg %p36
    $region23: #{tpu_custom_call.1} parent=1 // pred_check_branch
      %60 = sbr.rel (%p58) target = $region25
    $region24: #{tpu_custom_call.1} parent=1 // pred_region
      %v61 = vld [vmem:[#allocation2] sm:$0xff]
      %v62 = vld [vmem:[#allocation3] sm:$0xff]
      %v63 = vsub.f32 %v62, %v61
      %v64 = vadd.f32 %v63, 1e-08
      %v65 = vrcp.pop %v64
      %v66 = vmul.f32 %v61, %v65
      %v67 = vsub.f32 1.0, %v66
      %69 = vset.pattern.permute.xlu0 0
      %70 = vperm.xlu0 %69, %v67
      %v71 = vpop.permute.xlu0 %70
      %73 = vst [vmem:[#allocation9] sm:$0xff] %v71
    $region25: #{tpu_custom_call.1} parent=1 // pred_fallthru
      _
    // Predicated region
    $region26: #{tpu_custom_call.1} parent=1 // pred_check
      _
    $region27: #{tpu_custom_call.1} parent=1 // pred_check_branch
      %75 = sbr.rel (0) target = $region29
    $region28: #{tpu_custom_call.1} parent=1 // pred_region
      %s77 = ssub.s32 128, 128
      %78 = vsyncadd [#allocation6], %s77
      %s80 = sshll.u32 [#allocation9], 4
      %s81 = int_to_ptr.vmem [resolvable:$true] %s80
      %83 = dma.vmem_to_hbm [thread:$0]  %s81, 128, %s2, [#allocation6]
    $region29: #{tpu_custom_call.1} parent=1 // pred_fallthru
      _
    // Predicated region
    $region30: #{tpu_custom_call.1} parent=1 // pred_check
      _
    $region31: #{tpu_custom_call.1} parent=1 // pred_check_branch
      %85 = sbr.rel (0) target = $region33
    $region32: #{tpu_custom_call.1} parent=1 // pred_region
      %86 = dma.done [#allocation6], 128
    $region33: #{tpu_custom_call.1} parent=1 // pred_fallthru
      _
    %87 = vsyncpa [#allocation5], 1
    %88 = vsyncpa [#allocation8], 1
    %89 = vsyncpa [#allocation6], 1

</llo_original>
